<compile_context>
chip_gen: v6e
topology: v6e:2x2x1
jax: 0.10.0
libtpu: 0.0.40
codegen_flags: <defaults>
</compile_context>

<pallas_src>
import math
import jax
import jax.numpy as jnp
from jax.experimental import pallas as pl
from jax.experimental.pallas import tpu as pltpu


def _mlp_kernel(x_ref, w1_ref, b1_ref, w2_ref, b2_ref, w3_ref, b3_ref, o_ref):
    # Fused fc1 -> ReLU -> fc2 -> ReLU -> output, all f32 (memory-bound kernel,
    # MXU/VALU have huge slack so full-precision matmuls are free).
    x = x_ref[...]                                                       # [bm, in]
    h = jnp.dot(x, w1_ref[...], preferred_element_type=jnp.float32) + b1_ref[...]
    h = jnp.maximum(h, 0.0)                                              # [bm, hid]
    h = jnp.dot(h, w2_ref[...], preferred_element_type=jnp.float32) + b2_ref[...]
    h = jnp.maximum(h, 0.0)                                              # [bm, hid]
    out = jnp.dot(h, w3_ref[...], preferred_element_type=jnp.float32) + b3_ref[...]
    o_ref[...] = out.astype(o_ref.dtype)                                 # [bm, out]


def _num_tensorcores() -> int:
    # Best-effort: v7x has 2 TensorCores per chip, v5e/v6e have 1.
    try:
        kind = jax.devices()[0].device_kind.lower()
        if "7" in kind:
            return 2
    except Exception:
        pass
    return 1


def _pick_block_batch(batch: int, num_cores: int) -> int:
    # A whole-batch single tile is always legal (block dims == full array dims).
    if batch % 8 != 0:
        return batch
    if num_cores >= 2:
        # Megacore: want an even grid with >= 2 steps per core so both
        # TensorCores get work AND each core still double-buffers its x/out DMAs.
        for cand in (1024, 512, 256, 128, 64, 32, 16, 8):
            if batch % cand == 0:
                steps = batch // cand
                if steps >= 4 and steps % 2 == 0:
                    return cand
        for cand in (2048, 1024, 512, 256, 128, 64, 32, 16, 8):
            if batch % cand == 0 and (batch // cand) == 2:
                return cand
        return batch
    # Single TensorCore (v5e / v6e): per-step overhead (~0.35 us) dominates at
    # these sizes, so use one big tile; only tile genuinely large batches.
    if batch <= 4096:
        return batch
    for cand in (4096, 2048, 1024, 512, 256, 128, 64, 32, 16, 8):
        if batch % cand == 0:
            return cand
    return batch


def prey_policy_net(x, params, *, block_batch=None):
    """Forward pass of PreyPolicyNet via a single fused Pallas kernel.

    x:      [batch, input_dim] float32
    params: dict with w1 [in,h], b1 [1,h], w2 [h,h], b2 [1,h], w3 [h,out], b3 [1,out]
            (use `prepare_params` / `init_params` to build this layout once).
    Returns [batch, output_dim] float32.
    """
    x = x.astype(jnp.float32)
    batch, input_dim = x.shape
    hidden_dim = params["w1"].shape[1]
    output_dim = params["w3"].shape[1]

    if block_batch is None:
        bm = _pick_block_batch(batch, _num_tensorcores())
    else:
        bm = int(block_batch)
        if bm != batch and (bm % 8 != 0 or batch % bm != 0):
            raise ValueError("block_batch must equal batch, or be a multiple of "
                             "8 that divides batch")

    grid = (batch // bm,)

    # Weights / biases revisit block (0, 0) every grid step, so Pallas keeps
    # them resident in VMEM and does not re-DMA them; only the x / out streams
    # are pipelined.  Blocks whose last dim equals the full array dim (27 / 64 /
    # 6 / 1) are legal regardless of (8, 128) divisibility.
    const = lambda shape: pl.BlockSpec(shape, lambda i: (0, 0))

    return pl.pallas_call(
        _mlp_kernel,
        out_shape=jax.ShapeDtypeStruct((batch, output_dim), jnp.float32),
        grid_spec=pltpu.PrefetchScalarGridSpec(
            num_scalar_prefetch=0,
            grid=grid,
            in_specs=[
                pl.BlockSpec((bm, input_dim), lambda i: (i, 0)),   # x tile (pipelined)
                const((input_dim, hidden_dim)),                    # w1
                const((1, hidden_dim)),                            # b1
                const((hidden_dim, hidden_dim)),                   # w2
                const((1, hidden_dim)),                            # b2
                const((hidden_dim, output_dim)),                   # w3
                const((1, output_dim)),                            # b3
            ],
            out_specs=pl.BlockSpec((bm, output_dim), lambda i: (i, 0)),
        ),
        compiler_params=pltpu.CompilerParams(
            dimension_semantics=("parallel",),   # independent batch tiles -> megacore shard
        ),
    )(x, params["w1"], params["b1"], params["w2"], params["b2"],
      params["w3"], params["b3"])


def prepare_params(params):
    """Normalize params ONCE (outside the per-call path): f32 dtype, weights
    kept as [in, out], biases reshaped to [1, out] (accepts (n,) biases)."""
    def w(a):
        return jnp.asarray(a, jnp.float32)

    def b(a):
        return jnp.asarray(a, jnp.float32).reshape(1, -1)

    return {"w1": w(params["w1"]), "b1": b(params["b1"]),
            "w2": w(params["w2"]), "b2": b(params["b2"]),
            "w3": w(params["w3"]), "b3": b(params["b3"])}


def init_params(key, input_dim=27, hidden_dim=64, output_dim=6):
    """Deterministic init matching nn.Linear's U(-1/sqrt(fan_in), 1/sqrt(fan_in))."""
    ks = jax.random.split(key, 6)

    def linear(kw, kb, fan_in, fan_out):
        bound = 1.0 / math.sqrt(fan_in)
        # stored as [in, out] so the kernel does x @ W + b
        w = jax.random.uniform(kw, (fan_in, fan_out), jnp.float32, -bound, bound)
        b = jax.random.uniform(kb, (1, fan_out), jnp.float32, -bound, bound)
        return w, b

    w1, b1 = linear(ks[0], ks[1], input_dim, hidden_dim)
    w2, b2 = linear(ks[2], ks[3], hidden_dim, hidden_dim)
    w3, b3 = linear(ks[4], ks[5], hidden_dim, output_dim)
    return {"w1": w1, "b1": b1, "w2": w2, "b2": b2, "w3": w3, "b3": b3}


def reference_forward(x, p):
    """Plain-JAX f32 reference of the PyTorch forward pass."""
    h1 = jnp.maximum(x @ p["w1"] + p["b1"], 0.0)
    h2 = jnp.maximum(h1 @ p["w2"] + p["b2"], 0.0)
    return h2 @ p["w3"] + p["b3"]


if __name__ == "__main__":
    key = jax.random.PRNGKey(0)
    kp, kx = jax.random.split(key)

    input_dim, hidden_dim, output_dim = 27, 64, 6

    params = prepare_params(init_params(kp, input_dim, hidden_dim, output_dim))

    # Small batch: whole-batch single tile (block dims == full array dims).
    batch = 8
    x = jax.random.normal(kx, (batch, input_dim), dtype=jnp.float32)
    out = jax.block_until_ready(prey_policy_net(x, params))
    assert out.shape == (batch, output_dim)
    ref = reference_forward(x, params)
    # Tolerance covers MXU pass-count differences between the kernel and the
    # XLA reference; math is f32 end to end.
    assert jnp.allclose(out, ref, atol=2e-2, rtol=1e-2), "mismatch vs f32 reference (small batch)"

    # Exercise the multi-tile pipelined grid path as well (grid=(4,)).
    xb = jax.random.normal(jax.random.PRNGKey(1), (64, input_dim), dtype=jnp.float32)
    outb = jax.block_until_ready(prey_policy_net(xb, params, block_batch=16))
    assert outb.shape == (64, output_dim)
    refb = reference_forward(xb, params)
    assert jnp.allclose(outb, refb, atol=2e-2, rtol=1e-2), "mismatch vs f32 reference (tiled batch)"

    print("KERNEL_OK")
</pallas_src>

<mosaic_0001>
module attributes {stable_mosaic.version = 11 : i64} {
  func.func @_mlp_kernel(%arg0: i32, %arg1: memref<8x27xf32, #tpu.memory_space<vmem>>, %arg2: memref<27x64xf32, #tpu.memory_space<vmem>>, %arg3: memref<1x64xf32, #tpu.memory_space<vmem>>, %arg4: memref<64x64xf32, #tpu.memory_space<vmem>>, %arg5: memref<1x64xf32, #tpu.memory_space<vmem>>, %arg6: memref<64x6xf32, #tpu.memory_space<vmem>>, %arg7: memref<1x6xf32, #tpu.memory_space<vmem>>, %arg8: memref<8x6xf32, #tpu.memory_space<vmem>>) attributes {dimension_semantics = [#tpu.dimension_semantics<parallel>], iteration_bounds = array<i64: 1>, scalar_prefetch = 0 : i64, scratch_operands = 0 : i64, tpu.core_type = #tpu.core_type<tc>, window_params = [{transform_indices = @transform_0, window_bounds = array<i64: 8, 27>}, {pipeline_mode = #tpu.pipeline_mode<synchronous>, transform_indices = @transform_1, window_bounds = array<i64: 27, 64>}, {pipeline_mode = #tpu.pipeline_mode<synchronous>, transform_indices = @transform_2, window_bounds = array<i64: 1, 64>}, {pipeline_mode = #tpu.pipeline_mode<synchronous>, transform_indices = @transform_3, window_bounds = array<i64: 64, 64>}, {pipeline_mode = #tpu.pipeline_mode<synchronous>, transform_indices = @transform_4, window_bounds = array<i64: 1, 64>}, {pipeline_mode = #tpu.pipeline_mode<synchronous>, transform_indices = @transform_5, window_bounds = array<i64: 64, 6>}, {pipeline_mode = #tpu.pipeline_mode<synchronous>, transform_indices = @transform_6, window_bounds = array<i64: 1, 6>}, {transform_indices = @transform_7, window_bounds = array<i64: 8, 6>}]} {
    %c0 = arith.constant 0 : index
    %c0_0 = arith.constant 0 : index
    %0 = vector.load %arg1[%c0, %c0_0] : memref<8x27xf32, #tpu.memory_space<vmem>>, vector<8x27xf32>
    %c0_1 = arith.constant 0 : index
    %c0_2 = arith.constant 0 : index
    %1 = vector.load %arg2[%c0_1, %c0_2] : memref<27x64xf32, #tpu.memory_space<vmem>>, vector<27x64xf32>
    %cst = arith.constant dense<0.000000e+00> : vector<8x64xf32>
    %2 = tpu.matmul %0, %1, %cst {dimension_numbers = #tpu.dot_dimension_numbers<[1], [0], [0], [1], [0, 0, 1, 1], [], []>} : vector<8x27xf32>, vector<27x64xf32>, vector<8x64xf32> -> vector<8x64xf32>
    %c0_3 = arith.constant 0 : index
    %c0_4 = arith.constant 0 : index
    %3 = vector.load %arg3[%c0_3, %c0_4] : memref<1x64xf32, #tpu.memory_space<vmem>>, vector<1x64xf32>
    %4 = vector.broadcast %3 : vector<1x64xf32> to vector<8x64xf32>
    %5 = arith.addf %2, %4 : vector<8x64xf32>
    %cst_5 = arith.constant 0.000000e+00 : f32
    %6 = vector.broadcast %cst_5 : f32 to vector<8x64xf32>
    %7 = arith.maximumf %5, %6 : vector<8x64xf32>
    %c0_6 = arith.constant 0 : index
    %c0_7 = arith.constant 0 : index
    %8 = vector.load %arg4[%c0_6, %c0_7] : memref<64x64xf32, #tpu.memory_space<vmem>>, vector<64x64xf32>
    %cst_8 = arith.constant dense<0.000000e+00> : vector<8x64xf32>
    %9 = tpu.matmul %7, %8, %cst_8 {dimension_numbers = #tpu.dot_dimension_numbers<[1], [0], [0], [1], [0, 0, 1, 1], [], []>} : vector<8x64xf32>, vector<64x64xf32>, vector<8x64xf32> -> vector<8x64xf32>
    %c0_9 = arith.constant 0 : index
    %c0_10 = arith.constant 0 : index
    %10 = vector.load %arg5[%c0_9, %c0_10] : memref<1x64xf32, #tpu.memory_space<vmem>>, vector<1x64xf32>
    %11 = vector.broadcast %10 : vector<1x64xf32> to vector<8x64xf32>
    %12 = arith.addf %9, %11 : vector<8x64xf32>
    %cst_11 = arith.constant 0.000000e+00 : f32
    %13 = vector.broadcast %cst_11 : f32 to vector<8x64xf32>
    %14 = arith.maximumf %12, %13 : vector<8x64xf32>
    %c0_12 = arith.constant 0 : index
    %c0_13 = arith.constant 0 : index
    %15 = vector.load %arg6[%c0_12, %c0_13] : memref<64x6xf32, #tpu.memory_space<vmem>>, vector<64x6xf32>
    %cst_14 = arith.constant dense<0.000000e+00> : vector<8x6xf32>
    %16 = tpu.matmul %14, %15, %cst_14 {dimension_numbers = #tpu.dot_dimension_numbers<[1], [0], [0], [1], [0, 0, 1, 1], [], []>} : vector<8x64xf32>, vector<64x6xf32>, vector<8x6xf32> -> vector<8x6xf32>
    %c0_15 = arith.constant 0 : index
    %c0_16 = arith.constant 0 : index
    %17 = vector.load %arg7[%c0_15, %c0_16] : memref<1x6xf32, #tpu.memory_space<vmem>>, vector<1x6xf32>
    %18 = vector.broadcast %17 : vector<1x6xf32> to vector<8x6xf32>
    %19 = arith.addf %16, %18 : vector<8x6xf32>
    %c0_17 = arith.constant 0 : index
    %c0_18 = arith.constant 0 : index
    %20 = vector.load %arg8[%c0_17, %c0_18] : memref<8x6xf32, #tpu.memory_space<vmem>>, vector<8x6xf32>
    tpu.vector_store %arg8[%c0_17, %c0_18], %19 {strides = array<i32>} : memref<8x6xf32, #tpu.memory_space<vmem>>, vector<8x6xf32>,
    return
  }
  func.func @transform_0(%arg0: i32) -> (i32, i32) {
    %c0_i32 = arith.constant 0 : i32
    %c0_i32_0 = arith.constant 0 : i32
    return %arg0, %c0_i32 : i32, i32
  }
  func.func @transform_1(%arg0: i32) -> (i32, i32) {
    %c0_i32 = arith.constant 0 : i32
    %c0_i32_0 = arith.constant 0 : i32
    %c0_i32_1 = arith.constant 0 : i32
    return %c0_i32, %c0_i32_0 : i32, i32
  }
  func.func @transform_2(%arg0: i32) -> (i32, i32) {
    %c0_i32 = arith.constant 0 : i32
    %c0_i32_0 = arith.constant 0 : i32
    %c0_i32_1 = arith.constant 0 : i32
    return %c0_i32, %c0_i32_0 : i32, i32
  }
  func.func @transform_3(%arg0: i32) -> (i32, i32) {
    %c0_i32 = arith.constant 0 : i32
    %c0_i32_0 = arith.constant 0 : i32
    %c0_i32_1 = arith.constant 0 : i32
    return %c0_i32, %c0_i32_0 : i32, i32
  }
  func.func @transform_4(%arg0: i32) -> (i32, i32) {
    %c0_i32 = arith.constant 0 : i32
    %c0_i32_0 = arith.constant 0 : i32
    %c0_i32_1 = arith.constant 0 : i32
    return %c0_i32, %c0_i32_0 : i32, i32
  }
  func.func @transform_5(%arg0: i32) -> (i32, i32) {
    %c0_i32 = arith.constant 0 : i32
    %c0_i32_0 = arith.constant 0 : i32
    %c0_i32_1 = arith.constant 0 : i32
    return %c0_i32, %c0_i32_0 : i32, i32
  }
  func.func @transform_6(%arg0: i32) -> (i32, i32) {
    %c0_i32 = arith.constant 0 : i32
    %c0_i32_0 = arith.constant 0 : i32
    %c0_i32_1 = arith.constant 0 : i32
    return %c0_i32, %c0_i32_0 : i32, i32
  }
  func.func @transform_7(%arg0: i32) -> (i32, i32) {
    %c0_i32 = arith.constant 0 : i32
    %c0_i32_0 = arith.constant 0 : i32
    return %arg0, %c0_i32 : i32, i32
  }
}

</mosaic_0001>

<llo_original>
// kernel: tpu_custom_call.1
$region0: #{tpu_custom_call.1}
  #allocation0 [shape = 'u32[]', space=smem, size = 0x4, offset = 0x4, fixed_abs, tag = 'smem constant byte address 0x4 - core index']
  #allocation1 [shape = 'u32[144,128]{1,0:T(1,128)}', space=vmem, size = 0x12000, scoped, tag = 'internal scratch']
  %s0 = inlined_call_operand.vmem [shape: f32[8,27], index: 0, kind: input, shape index: {}]
  %s1 = inlined_call_operand.hbm [shape: f32[27,64], index: 1, kind: input, shape index: {}]
  %s2 = inlined_call_operand.vmem [shape: f32[1,64], index: 2, kind: input, shape index: {}]
  %s3 = inlined_call_operand.vmem [shape: f32[64,64], index: 3, kind: input, shape index: {}]
  %s4 = inlined_call_operand.hbm [shape: f32[1,64], index: 4, kind: input, shape index: {}]
  %s5 = inlined_call_operand.vmem [shape: f32[64,6], index: 5, kind: input, shape index: {}]
  %s6 = inlined_call_operand.vmem [shape: f32[1,6], index: 6, kind: input, shape index: {}]
  %s7 = inlined_call_operand.hbm [shape: f32[8,6], index: 7, kind: output, shape index: {}]
  %s8 = sld [smem:[#allocation0]]
  $region46: #{tpu_custom_call.1} parent=0
    _
  %s10 = ssub.s32 1, %s8
  %s11 = scalar_select 0, %s10, %s8
  $region1: #{tpu_custom_call.1} parent=0
    #allocation2 [shape = 'u8[16384]{0}', space=vmem, size = 0x4000, scoped, tag = 'input window, operand 1, single buffered']
    #allocation3 [shape = 's32[1]{0}', space=sflag, size = 0x4, scoped, tag = 'scoped memory for tpu_custom_call.1']
    #allocation4 [shape = 's32[1]{0}', space=sflag, size = 0x4, scoped, tag = 'scoped memory for tpu_custom_call.1']
    #allocation5 [shape = 'u8[512]{0}', space=vmem, size = 0x400, scoped, tag = 'input window, operand 4, single buffered']
    #allocation6 [shape = 's32[1]{0}', space=sflag, size = 0x4, scoped, tag = 'scoped memory for tpu_custom_call.1']
    #allocation7 [shape = 'u8[4096]{0}', space=vmem, size = 0x1000, scoped, tag = 'output window, operand 0, single buffered']
    %12 = vsyncpa [#allocation3], 0
    %13 = vsyncpa [#allocation6], 0
    %14 = vsyncpa [#allocation4], 0
    // Predicated region
    $region2: #{tpu_custom_call.1} parent=1 // pred_check
      _
    $region3: #{tpu_custom_call.1} parent=1 // pred_check_branch
      %16 = sbr.rel (0) target = $region5
    $region4: #{tpu_custom_call.1} parent=1 // pred_region
      _
    $region5: #{tpu_custom_call.1} parent=1 // pred_fallthru
      _
    // Predicated region
    $region6: #{tpu_custom_call.1} parent=1 // pred_check
      _
    $region7: #{tpu_custom_call.1} parent=1 // pred_check_branch
      %18 = sbr.rel (0) target = $region9
    $region8: #{tpu_custom_call.1} parent=1 // pred_region
      %s20 = ssub.s32 512, 512
      %21 = vsyncadd [#allocation3], %s20
      %s22 = sshll.u32 [#allocation2], 4
      %s23 = int_to_ptr.vmem [resolvable:$true] %s22
      %28 = dma.hbm_to_vmem [thread:$0]  %s1, 512, %s23, [#allocation3], 128, 128, 8
    $region9: #{tpu_custom_call.1} parent=1 // pred_fallthru
      _
    // Predicated region
    $region10: #{tpu_custom_call.1} parent=1 // pred_check
      _
    $region11: #{tpu_custom_call.1} parent=1 // pred_check_branch
      %30 = sbr.rel (0) target = $region13
    $region12: #{tpu_custom_call.1} parent=1 // pred_region
      _
    $region13: #{tpu_custom_call.1} parent=1 // pred_fallthru
      _
    // Predicated region
    $region14: #{tpu_custom_call.1} parent=1 // pred_check
      _
    $region15: #{tpu_custom_call.1} parent=1 // pred_check_branch
      %32 = sbr.rel (0) target = $region17
    $region16: #{tpu_custom_call.1} parent=1 // pred_region
      _
    $region17: #{tpu_custom_call.1} parent=1 // pred_fallthru
      _
    // Predicated region
    $region18: #{tpu_custom_call.1} parent=1 // pred_check
      _
    $region19: #{tpu_custom_call.1} parent=1 // pred_check_branch
      %34 = sbr.rel (0) target = $region21
    $region20: #{tpu_custom_call.1} parent=1 // pred_region
      %s36 = ssub.s32 16, 16
      %37 = vsyncadd [#allocation6], %s36
      %s39 = sshll.u32 [#allocation5], 4
      %s40 = int_to_ptr.vmem [resolvable:$true] %s39
      %42 = dma.hbm_to_vmem [thread:$0]  %s4, 16, %s40, [#allocation6]
    $region21: #{tpu_custom_call.1} parent=1 // pred_fallthru
      _
    // Predicated region
    $region22: #{tpu_custom_call.1} parent=1 // pred_check
      _
    $region23: #{tpu_custom_call.1} parent=1 // pred_check_branch
      %44 = sbr.rel (0) target = $region25
    $region24: #{tpu_custom_call.1} parent=1 // pred_region
      _
    $region25: #{tpu_custom_call.1} parent=1 // pred_fallthru
      _
    // Predicated region
    $region26: #{tpu_custom_call.1} parent=1 // pred_check
      _
    $region27: #{tpu_custom_call.1} parent=1 // pred_check_branch
      %46 = sbr.rel (0) target = $region29
    $region28: #{tpu_custom_call.1} parent=1 // pred_region
      _
    $region29: #{tpu_custom_call.1} parent=1 // pred_fallthru
      _
    // Predicated region
    $region30: #{tpu_custom_call.1} parent=1 // pred_check
      _
    $region31: #{tpu_custom_call.1} parent=1 // pred_check_branch
      %48 = sbr.rel (0) target = $region33
    $region32: #{tpu_custom_call.1} parent=1 // pred_region
      %49 = dma.done [#allocation3], 512
    $region33: #{tpu_custom_call.1} parent=1 // pred_fallthru
      _
    // Predicated region
    $region34: #{tpu_custom_call.1} parent=1 // pred_check
      _
    $region35: #{tpu_custom_call.1} parent=1 // pred_check_branch
      %51 = sbr.rel (0) target = $region37
    $region36: #{tpu_custom_call.1} parent=1 // pred_region
      %52 = dma.done [#allocation6], 16
    $region37: #{tpu_custom_call.1} parent=1 // pred_fallthru
      _
    %v53 = vld [vmem:[%s0] sm:$0xff]
    %v54 = vld [vmem:[#allocation2] sm:$0xff]
    %v55 = vld [vmem:[#allocation2 + $0x8] sm:$0xff]
    %v56 = vld [vmem:[#allocation2 + $0x10] sm:$0xff]
    %v57 = vld [vmem:[#allocation2 + $0x18] sm:$0x7]
    %v58 = vld [vmem:[%s2] sm:$0x1]
    %v60 = vlaneseq
    %v61 = vshrl.u32 %v60, 7
    %v62 = vsub.s32 0, %v61
    %v63 = vrot.slane %v58, %v62
    %vm65 = vcmask 220160
    %v67 = vsel %vm65, %v53, 0
    %vm69 = vcmask 1042432
    %v71 = vsel %vm69, %v57, 0
    %73 = vmatprep.subr.mxu0 0.0
    %74 = vmatpush1.msra.mxu0 0.0
    %75 = vmatprep.subr.mxu0 0.0
    %76 = vmatpush1.msra.mxu0 0.0
    %77 = vmatprep.subr.mxu0 0.0
    %78 = vmatpush1.msra.mxu0 0.0
    %79 = vmatprep.subr.mxu0 0.0
    %80 = vmatpush1.msra.mxu0 0.0
    %81 = vmatprep.subr.mxu0 0.0
    %82 = vmatpush1.msra.mxu0 0.0
    %83 = vmatprep.subr.mxu0 0.0
    %84 = vmatpush1.msra.mxu0 0.0
    %85 = vmatprep.subr.mxu0 0.0
    %86 = vmatpush1.msra.mxu0 0.0
    %87 = vmatprep.subr.mxu0 0.0
    %88 = vmatpush1.msra.mxu0 0.0
    %89 = vmatprep.subr.mxu0 0.0
    %90 = vmatpush1.msra.mxu0 0.0
    %91 = vmatprep.subr.mxu0 0.0
    %92 = vmatpush1.msra.mxu0 0.0
    %93 = vmatprep.subr.mxu0 0.0
    %94 = vmatpush1.msra.mxu0 0.0
    %95 = vmatprep.subr.mxu0 0.0
    %96 = vmatpush1.msra.mxu0 0.0
    %97 = vmatprep.subr.mxu0 0.0
    %98 = vmatpush1.msra.mxu0 %v71
    %99 = vmatprep.subr.mxu0 0.0
    %100 = vmatpush1.msra.mxu0 %v56
    %101 = vmatprep.subr.mxu0 0.0
    %102 = vmatpush1.msra.mxu0 %v55
    %103 = vmatprep.subr.mxu0 0.0
    %104 = vmatpush1.msra.mxu0 %v54
    %105 = vmatprep.subr.mxu0 0.0
    %106 = vmatpush2.msra.mxu0 0.0
    %107 = vmatprep.subr.mxu0 0.0
    %108 = vmatpush2.msra.mxu0 0.0
    %109 = vmatprep.subr.mxu0 0.0
    %110 = vmatpush2.msra.mxu0 0.0
    %111 = vmatprep.subr.mxu0 0.0
    %112 = vmatpush2.msra.mxu0 0.0
    %113 = vmatprep.subr.mxu0 0.0
    %114 = vmatpush2.msra.mxu0 0.0
    %115 = vmatprep.subr.mxu0 0.0
    %116 = vmatpush2.msra.mxu0 0.0
    %117 = vmatprep.subr.mxu0 0.0
    %118 = vmatpush2.msra.mxu0 0.0
    %119 = vmatprep.subr.mxu0 0.0
    %120 = vmatpush2.msra.mxu0 0.0
    %121 = vmatprep.subr.mxu0 0.0
    %122 = vmatpush2.msra.mxu0 0.0
    %123 = vmatprep.subr.mxu0 0.0
    %124 = vmatpush2.msra.mxu0 0.0
    %125 = vmatprep.subr.mxu0 0.0
    %126 = vmatpush2.msra.mxu0 0.0
    %127 = vmatprep.subr.mxu0 0.0
    %128 = vmatpush2.msra.mxu0 0.0
    %129 = vmatprep.subr.mxu0 0.0
    %130 = vmatpush2.msra.mxu0 0.0
    %131 = vmatprep.subr.mxu0 0.0
    %132 = vmatpush2.msra.mxu0 0.0
    %133 = vmatprep.subr.mxu0 0.0
    %134 = vmatpush2.msra.mxu0 0.0
    %135 = vmatprep.subr.mxu0 0.0
    %136 = vmatpush2.msra.mxu0 0.0
    %137 = vmatprep.mubr.f32.mxu0 0.0
    %138 = vmatmul.mubr.f32.gmra.mxu0 %v67
    %v139 = vpop.f32.mrf.mxu0
    %v140 = vadd.f32 %v63, %v139
    %v141 = vpop.f32.mrf.mxu0
    %142 = vdwg.mxu0
    %v143 = vmax.f32 %v140, 0.0
    %v144 = vld [vmem:[%s3] sm:$0xff]
    %v145 = vld [vmem:[%s3 + $0x8] sm:$0xff]
    %v146 = vld [vmem:[%s3 + $0x10] sm:$0xff]
    %v147 = vld [vmem:[%s3 + $0x18] sm:$0xff]
    %v148 = vld [vmem:[%s3 + $0x20] sm:$0xff]
    %v149 = vld [vmem:[%s3 + $0x28] sm:$0xff]
    %v150 = vld [vmem:[%s3 + $0x30] sm:$0xff]
    %v151 = vld [vmem:[%s3 + $0x38] sm:$0xff]
    %v152 = vld [vmem:[#allocation5] sm:$0x1]
    %v154 = vlaneseq
    %v155 = vshrl.u32 %v154, 7
    %v156 = vsub.s32 0, %v155
    %v157 = vrot.slane %v152, %v156
    %vm159 = vcmask 523264
    %v161 = vsel %vm159, %v143, 0
    %163 = vmatprep.subr.mxu0 0.0
    %164 = vmatpush1.msra.mxu0 0.0
    %165 = vmatprep.subr.mxu0 0.0
    %166 = vmatpush1.msra.mxu0 0.0
    %167 = vmatprep.subr.mxu0 0.0
    %168 = vmatpush1.msra.mxu0 0.0
    %169 = vmatprep.subr.mxu0 0.0
    %170 = vmatpush1.msra.mxu0 0.0
    %171 = vmatprep.subr.mxu0 0.0
    %172 = vmatpush1.msra.mxu0 0.0
    %173 = vmatprep.subr.mxu0 0.0
    %174 = vmatpush1.msra.mxu0 0.0
    %175 = vmatprep.subr.mxu0 0.0
    %176 = vmatpush1.msra.mxu0 0.0
    %177 = vmatprep.subr.mxu0 0.0
    %178 = vmatpush1.msra.mxu0 0.0
    %179 = vmatprep.subr.mxu0 0.0
    %180 = vmatpush1.msra.mxu0 %v151
    %181 = vmatprep.subr.mxu0 0.0
    %182 = vmatpush1.msra.mxu0 %v150
    %183 = vmatprep.subr.mxu0 0.0
    %184 = vmatpush1.msra.mxu0 %v149
    %185 = vmatprep.subr.mxu0 0.0
    %186 = vmatpush1.msra.mxu0 %v148
    %187 = vmatprep.subr.mxu0 0.0
    %188 = vmatpush1.msra.mxu0 %v147
    %189 = vmatprep.subr.mxu0 0.0
    %190 = vmatpush1.msra.mxu0 %v146
    %191 = vmatprep.subr.mxu0 0.0
    %192 = vmatpush1.msra.mxu0 %v145
    %193 = vmatprep.subr.mxu0 0.0
    %194 = vmatpush1.msra.mxu0 %v144
    %195 = vmatprep.subr.mxu0 0.0
    %196 = vmatpush2.msra.mxu0 0.0
    %197 = vmatprep.subr.mxu0 0.0
    %198 = vmatpush2.msra.mxu0 0.0
    %199 = vmatprep.subr.mxu0 0.0
    %200 = vmatpush2.msra.mxu0 0.0
    %201 = vmatprep.subr.mxu0 0.0
    %202 = vmatpush2.msra.mxu0 0.0
    %203 = vmatprep.subr.mxu0 0.0
    %204 = vmatpush2.msra.mxu0 0.0
    %205 = vmatprep.subr.mxu0 0.0
    %206 = vmatpush2.msra.mxu0 0.0
    %207 = vmatprep.subr.mxu0 0.0
    %208 = vmatpush2.msra.mxu0 0.0
    %209 = vmatprep.subr.mxu0 0.0
    %210 = vmatpush2.msra.mxu0 0.0
    %211 = vmatprep.subr.mxu0 0.0
    %212 = vmatpush2.msra.mxu0 0.0
    %213 = vmatprep.subr.mxu0 0.0
    %214 = vmatpush2.msra.mxu0 0.0
    %215 = vmatprep.subr.mxu0 0.0
    %216 = vmatpush2.msra.mxu0 0.0
    %217 = vmatprep.subr.mxu0 0.0
    %218 = vmatpush2.msra.mxu0 0.0
    %219 = vmatprep.subr.mxu0 0.0
    %220 = vmatpush2.msra.mxu0 0.0
    %221 = vmatprep.subr.mxu0 0.0
    %222 = vmatpush2.msra.mxu0 0.0
    %223 = vmatprep.subr.mxu0 0.0
    %224 = vmatpush2.msra.mxu0 0.0
    %225 = vmatprep.subr.mxu0 0.0
    %226 = vmatpush2.msra.mxu0 0.0
    %227 = vmatprep.mubr.f32.mxu0 0.0
    %228 = vmatmul.mubr.f32.gmra.mxu0 %v161
    %v229 = vpop.f32.mrf.mxu0
    %v230 = vadd.f32 %v157, %v229
    %v231 = vpop.f32.mrf.mxu0
    %232 = vdwg.mxu0
    %v233 = vmax.f32 %v230, 0.0
    %v234 = vld [vmem:[%s5] sm:$0xff]
    %v235 = vld [vmem:[%s5 + $0x8] sm:$0xff]
    %v236 = vld [vmem:[%s5 + $0x10] sm:$0xff]
    %v237 = vld [vmem:[%s5 + $0x18] sm:$0xff]
    %v238 = vld [vmem:[%s5 + $0x20] sm:$0xff]
    %v239 = vld [vmem:[%s5 + $0x28] sm:$0xff]
    %v240 = vld [vmem:[%s5 + $0x30] sm:$0xff]
    %v241 = vld [vmem:[%s5 + $0x38] sm:$0xff]
    %v242 = vld [vmem:[%s6] sm:$0x1]
    %v244 = vlaneseq
    %v245 = vshrl.u32 %v244, 7
    %v246 = vsub.s32 0, %v245
    %v247 = vrot.slane %v242, %v246
    %v250 = vsel %vm159, %v233, 0
    %252 = vmatprep.subr.mxu0 0.0
    %253 = vmatpush1.msra.mxu0 0.0
    %254 = vmatprep.subr.mxu0 0.0
    %255 = vmatpush1.msra.mxu0 0.0
    %256 = vmatprep.subr.mxu0 0.0
    %257 = vmatpush1.msra.mxu0 0.0
    %258 = vmatprep.subr.mxu0 0.0
    %259 = vmatpush1.msra.mxu0 0.0
    %260 = vmatprep.subr.mxu0 0.0
    %261 = vmatpush1.msra.mxu0 0.0
    %262 = vmatprep.subr.mxu0 0.0
    %263 = vmatpush1.msra.mxu0 0.0
    %264 = vmatprep.subr.mxu0 0.0
    %265 = vmatpush1.msra.mxu0 0.0
    %266 = vmatprep.subr.mxu0 0.0
    %267 = vmatpush1.msra.mxu0 0.0
    %268 = vmatprep.subr.mxu0 0.0
    %269 = vmatpush1.msra.mxu0 %v241
    %270 = vmatprep.subr.mxu0 0.0
    %271 = vmatpush1.msra.mxu0 %v240
    %272 = vmatprep.subr.mxu0 0.0
    %273 = vmatpush1.msra.mxu0 %v239
    %274 = vmatprep.subr.mxu0 0.0
    %275 = vmatpush1.msra.mxu0 %v238
    %276 = vmatprep.subr.mxu0 0.0
    %277 = vmatpush1.msra.mxu0 %v237
    %278 = vmatprep.subr.mxu0 0.0
    %279 = vmatpush1.msra.mxu0 %v236
    %280 = vmatprep.subr.mxu0 0.0
    %281 = vmatpush1.msra.mxu0 %v235
    %282 = vmatprep.subr.mxu0 0.0
    %283 = vmatpush1.msra.mxu0 %v234
    %284 = vmatprep.subr.mxu0 0.0
    %285 = vmatpush2.msra.mxu0 0.0
    %286 = vmatprep.subr.mxu0 0.0
    %287 = vmatpush2.msra.mxu0 0.0
    %288 = vmatprep.subr.mxu0 0.0
    %289 = vmatpush2.msra.mxu0 0.0
    %290 = vmatprep.subr.mxu0 0.0
    %291 = vmatpush2.msra.mxu0 0.0
    %292 = vmatprep.subr.mxu0 0.0
    %293 = vmatpush2.msra.mxu0 0.0
    %294 = vmatprep.subr.mxu0 0.0
    %295 = vmatpush2.msra.mxu0 0.0
    %296 = vmatprep.subr.mxu0 0.0
    %297 = vmatpush2.msra.mxu0 0.0
    %298 = vmatprep.subr.mxu0 0.0
    %299 = vmatpush2.msra.mxu0 0.0
    %300 = vmatprep.subr.mxu0 0.0
    %301 = vmatpush2.msra.mxu0 0.0
    %302 = vmatprep.subr.mxu0 0.0
    %303 = vmatpush2.msra.mxu0 0.0
    %304 = vmatprep.subr.mxu0 0.0
    %305 = vmatpush2.msra.mxu0 0.0
    %306 = vmatprep.subr.mxu0 0.0
    %307 = vmatpush2.msra.mxu0 0.0
    %308 = vmatprep.subr.mxu0 0.0
    %309 = vmatpush2.msra.mxu0 0.0
    %310 = vmatprep.subr.mxu0 0.0
    %311 = vmatpush2.msra.mxu0 0.0
    %312 = vmatprep.subr.mxu0 0.0
    %313 = vmatpush2.msra.mxu0 0.0
    %314 = vmatprep.subr.mxu0 0.0
    %315 = vmatpush2.msra.mxu0 0.0
    %316 = vmatprep.mubr.f32.mxu0 0.0
    %317 = vmatmul.mubr.f32.gmra.mxu0 %v250
    %v318 = vpop.f32.mrf.mxu0
    %v319 = vadd.f32 %v247, %v318
    %v320 = vpop.f32.mrf.mxu0
    %321 = vdwg.mxu0
    %vm322 = vcmask 48128
    %323 = vst.msk [vmem:[#allocation7] sm:$0xff] %vm322, %v319
    // Predicated region
    $region38: #{tpu_custom_call.1} parent=1 // pred_check
      _
    $region39: #{tpu_custom_call.1} parent=1 // pred_check_branch
      %325 = sbr.rel (0) target = $region41
    $region40: #{tpu_custom_call.1} parent=1 // pred_region
      %s327 = ssub.s32 128, 128
      %328 = vsyncadd [#allocation4], %s327
      %s330 = sshll.u32 [#allocation7], 4
      %s331 = int_to_ptr.vmem [resolvable:$true] %s330
      %333 = dma.vmem_to_hbm [thread:$0]  %s331, 128, %s7, [#allocation4]
    $region41: #{tpu_custom_call.1} parent=1 // pred_fallthru
      _
    // Predicated region
    $region42: #{tpu_custom_call.1} parent=1 // pred_check
      _
    $region43: #{tpu_custom_call.1} parent=1 // pred_check_branch
      %335 = sbr.rel (0) target = $region45
    $region44: #{tpu_custom_call.1} parent=1 // pred_region
      %336 = dma.done [#allocation4], 128
    $region45: #{tpu_custom_call.1} parent=1 // pred_fallthru
      _
    %337 = vsyncpa [#allocation3], 1
    %338 = vsyncpa [#allocation6], 1
    %339 = vsyncpa [#allocation4], 1

</llo_original>
